<compile_context>
chip_gen: v6e
topology: v6e:2x2x1
jax: 0.10.0
libtpu: 0.0.40
codegen_flags: <defaults>
</compile_context>

<pallas_src>
import functools

import jax
import jax.numpy as jnp
import numpy as np
from jax.experimental import pallas as pl
from jax.experimental.pallas import tpu as pltpu


# ---------------------------------------------------------------------------
# Phase 1: streamed mean-pool + batched context MLP + gate softmax.
# ---------------------------------------------------------------------------
def _gate_kernel(mask_ref, w1_ref, b1_ref, w2_ref, b2_ref, gw_ref, gb_ref,
                 vf_ref, af_ref, hf_ref,
                 weights_ref, coeff_ref,
                 accv_ref, acca_ref, acch_ref,
                 *, inv_seq):
    s = pl.program_id(0)

    @pl.when(s == 0)
    def _init():
        accv_ref[...] = jnp.zeros_like(accv_ref)
        acca_ref[...] = jnp.zeros_like(acca_ref)
        acch_ref[...] = jnp.zeros_like(acch_ref)

    # Per-tile partial sums over the sequence axis (cast per tile only; no
    # full-tensor f32 materialization).
    accv_ref[...] += jnp.sum(vf_ref[...].astype(jnp.float32), axis=1)
    acca_ref[...] += jnp.sum(af_ref[...].astype(jnp.float32), axis=1)
    acch_ref[...] += jnp.sum(hf_ref[...].astype(jnp.float32), axis=1)

    @pl.when(s == pl.num_programs(0) - 1)
    def _finalize():
        mask = mask_ref[...]                                              # (B, 3)
        B = mask.shape[0]
        pooled = jnp.concatenate(
            [accv_ref[...], acca_ref[...], acch_ref[...]], axis=0) * inv_seq   # (3B, H)

        # One batched context MLP for all three modalities.
        h1 = jnp.maximum(
            jnp.dot(pooled, w1_ref[...], preferred_element_type=jnp.float32)
            + b1_ref[...], 0.0)                                           # (3B, C)
        ctx = (jnp.dot(h1, w2_ref[...], preferred_element_type=jnp.float32)
               + b2_ref[...])                                             # (3B, H)
        mask_rows = jnp.concatenate(
            [mask[:, 0:1], mask[:, 1:2], mask[:, 2:3]], axis=0)           # (3B, 1)
        ctx = ctx * mask_rows

        # Per-modality gate score: row-wise dot with that modality's gate row.
        gw = gw_ref[...]                                                  # (3, H)
        sv = jnp.sum(ctx[0:B] * gw[0:1, :], axis=1, keepdims=True)
        sa = jnp.sum(ctx[B:2 * B] * gw[1:2, :], axis=1, keepdims=True)
        sh = jnp.sum(ctx[2 * B:3 * B] * gw[2:3, :], axis=1, keepdims=True)
        scores = jnp.concatenate([sv, sa, sh], axis=1) + gb_ref[...]      # (B, 3)

        m = jnp.max(scores, axis=1, keepdims=True)
        e = jnp.exp(scores - m)
        w = e / jnp.sum(e, axis=1, keepdims=True)                         # exact softmax
        weights_ref[...] = w
        coeff_ref[...] = w * mask


# ---------------------------------------------------------------------------
# Phase 2: streamed, lane-dense weighted fusion with per-batch scalar coeffs.
# ---------------------------------------------------------------------------
def _fuse_kernel(coeff_ref, vf_ref, af_ref, hf_ref, out_ref):
    b = pl.program_id(0)
    cv = coeff_ref[b, 0]           # scalar reads from SMEM
    ca = coeff_ref[b, 1]
    ch = coeff_ref[b, 2]
    out_ref[...] = (cv * vf_ref[...] + ca * af_ref[...]
                    + ch * hf_ref[...]).astype(out_ref.dtype)


def _pick_tile(total, candidates):
    """Largest candidate that exactly divides `total`; else the full extent."""
    for c in candidates:
        if c <= total and total % c == 0:
            return c
    return total


def dynamic_contextual_gating(visual_feat, audio_feat, hr_feat,
                              visual_mask, audio_mask, hr_mask, params):
    B, S, H = visual_feat.shape
    feat_dtype = visual_feat.dtype

    masks = jnp.stack([visual_mask, audio_mask, hr_mask], axis=1).astype(jnp.float32)  # (B, 3)

    # Pre-transpose / pack weights (glue) so the kernel does row-major matmuls.
    w1_t = params["fc1_w"].T.astype(jnp.float32)                  # (H, C)
    b1 = params["fc1_b"][None, :].astype(jnp.float32)             # (1, C)
    w2_t = params["fc2_w"].T.astype(jnp.float32)                  # (C, H)
    b2 = params["fc2_b"][None, :].astype(jnp.float32)             # (1, H)
    gw = jnp.concatenate(
        [params["gate_v_w"], params["gate_a_w"], params["gate_h_w"]],
        axis=0).astype(jnp.float32)                               # (3, H)
    gb = jnp.stack([params["gate_v_b"][0], params["gate_a_b"][0],
                    params["gate_h_b"][0]])[None, :].astype(jnp.float32)   # (1, 3)

    # -------------------- phase 1: pooled context + gate -------------------
    ts = _pick_tile(S, (1024, 512, 256, 128, 64, 32, 16, 8))
    n_seq = S // ts

    def const_spec(shape):
        return pl.BlockSpec(shape, lambda s, _n=len(shape): (0,) * _n)

    feat_pool_spec = pl.BlockSpec((B, ts, H), lambda s: (0, s, 0))

    weights, coeff = pl.pallas_call(
        functools.partial(_gate_kernel, inv_seq=1.0 / float(S)),
        out_shape=(jax.ShapeDtypeStruct((B, 3), jnp.float32),
                   jax.ShapeDtypeStruct((B, 3), jnp.float32)),
        grid=(n_seq,),
        in_specs=[const_spec((B, 3)),
                  const_spec(w1_t.shape), const_spec(b1.shape),
                  const_spec(w2_t.shape), const_spec(b2.shape),
                  const_spec(gw.shape), const_spec(gb.shape),
                  feat_pool_spec, feat_pool_spec, feat_pool_spec],
        out_specs=(pl.BlockSpec((B, 3), lambda s: (0, 0)),
                   pl.BlockSpec((B, 3), lambda s: (0, 0))),
        scratch_shapes=[pltpu.VMEM((B, H), jnp.float32) for _ in range(3)],
        compiler_params=pltpu.CompilerParams(
            dimension_semantics=("arbitrary",),
            vmem_limit_bytes=32 * 1024 * 1024),
    )(masks, w1_t, b1, w2_t, b2, gw, gb, visual_feat, audio_feat, hr_feat)

    # -------------------- phase 2: streamed fusion --------------------------
    L = S * H
    if L % 128 == 0:
        # Lane-dense layout: view each (B, S, H) tensor as (B, L/128, 128).
        R = L // 128
        r_tile = _pick_tile(R, (512, 256, 128, 64, 32, 16, 8))
        n_col = R // r_tile
        vf2 = visual_feat.reshape(B, R, 128)
        af2 = audio_feat.reshape(B, R, 128)
        hf2 = hr_feat.reshape(B, R, 128)
        blk = (1, r_tile, 128)
        out_struct = jax.ShapeDtypeStruct((B, R, 128), feat_dtype)
    else:
        # Fallback: keep (B, S, H) tiles (lane-sparse if H < 128 but correct).
        s_tile = _pick_tile(S, (1024, 512, 256, 128, 64, 32, 16, 8))
        n_col = S // s_tile
        vf2, af2, hf2 = visual_feat, audio_feat, hr_feat
        blk = (1, s_tile, H)
        out_struct = jax.ShapeDtypeStruct((B, S, H), feat_dtype)

    feat_fuse_spec = pl.BlockSpec(blk, lambda b, t: (b, t, 0))

    fused2 = pl.pallas_call(
        _fuse_kernel,
        out_shape=out_struct,
        grid=(B, n_col),
        in_specs=[pl.BlockSpec(memory_space=pltpu.MemorySpace.SMEM),   # coeff (B, 3)
                  feat_fuse_spec, feat_fuse_spec, feat_fuse_spec],
        out_specs=feat_fuse_spec,
        compiler_params=pltpu.CompilerParams(
            dimension_semantics=("parallel", "parallel"),
            vmem_limit_bytes=32 * 1024 * 1024),
    )(coeff, vf2, af2, hf2)

    fused = fused2.reshape(B, S, H)

    alpha = weights[:, 0:1]
    beta = weights[:, 1:2]
    gamma = weights[:, 2:3]
    return fused, (alpha, beta, gamma)


def _reference(visual, audio, hr, vm, am, hm, params):
    """Pure-JAX reference mirroring the PyTorch forward."""
    def encode(feat, mask):
        pooled = jnp.mean(feat, axis=1)
        h1 = jax.nn.relu(pooled @ params["fc1_w"].T + params["fc1_b"])
        ctx = h1 @ params["fc2_w"].T + params["fc2_b"]
        return ctx * mask[:, None]

    cv = encode(visual, vm)
    ca = encode(audio, am)
    ch = encode(hr, hm)
    sv = cv @ params["gate_v_w"].T + params["gate_v_b"]
    sa = ca @ params["gate_a_w"].T + params["gate_a_b"]
    sh = ch @ params["gate_h_w"].T + params["gate_h_b"]
    scores = jnp.concatenate([sv, sa, sh], axis=1)
    w = jax.nn.softmax(scores, axis=1)
    a, b, g = w[:, 0:1, None], w[:, 1:2, None], w[:, 2:3, None]
    fused = (a * visual * vm[:, None, None]
             + b * audio * am[:, None, None]
             + g * hr * hm[:, None, None])
    return fused, (w[:, 0:1], w[:, 1:2], w[:, 2:3])


if __name__ == "__main__":
    B, S, H, C = 2, 8, 32, 16   # batch, seq_len, hidden_dim, context_dim

    key = jax.random.PRNGKey(0)
    keys = jax.random.split(key, 12)

    visual = jax.random.normal(keys[0], (B, S, H), dtype=jnp.float32)
    audio = jax.random.normal(keys[1], (B, S, H), dtype=jnp.float32)
    hr = jax.random.normal(keys[2], (B, S, H), dtype=jnp.float32)
    visual_mask = jnp.array([1.0, 1.0], dtype=jnp.float32)
    audio_mask = jnp.array([1.0, 0.0], dtype=jnp.float32)
    hr_mask = jnp.array([0.0, 1.0], dtype=jnp.float32)

    scale = 0.1
    params = {
        "fc1_w": scale * jax.random.normal(keys[3], (C, H), dtype=jnp.float32),
        "fc1_b": scale * jax.random.normal(keys[4], (C,), dtype=jnp.float32),
        "fc2_w": scale * jax.random.normal(keys[5], (H, C), dtype=jnp.float32),
        "fc2_b": scale * jax.random.normal(keys[6], (H,), dtype=jnp.float32),
        "gate_v_w": scale * jax.random.normal(keys[7], (1, H), dtype=jnp.float32),
        "gate_v_b": scale * jax.random.normal(keys[8], (1,), dtype=jnp.float32),
        "gate_a_w": scale * jax.random.normal(keys[9], (1, H), dtype=jnp.float32),
        "gate_a_b": scale * jax.random.normal(keys[10], (1,), dtype=jnp.float32),
        "gate_h_w": scale * jax.random.normal(keys[11], (1, H), dtype=jnp.float32),
        "gate_h_b": jnp.zeros((1,), dtype=jnp.float32),
    }

    fused, (alpha, beta, gamma) = dynamic_contextual_gating(
        visual, audio, hr, visual_mask, audio_mask, hr_mask, params)
    jax.block_until_ready(fused)

    ref_fused, (ra, rb, rg) = _reference(
        visual, audio, hr, visual_mask, audio_mask, hr_mask, params)

    assert np.allclose(np.asarray(fused), np.asarray(ref_fused), atol=1e-5, rtol=1e-5)
    assert np.allclose(np.asarray(alpha), np.asarray(ra), atol=1e-5, rtol=1e-5)
    assert np.allclose(np.asarray(beta), np.asarray(rb), atol=1e-5, rtol=1e-5)
    assert np.allclose(np.asarray(gamma), np.asarray(rg), atol=1e-5, rtol=1e-5)

    print("KERNEL_OK")
</pallas_src>

<mosaic_0001>
module attributes {stable_mosaic.version = 11 : i64} {
  func.func @_gate_kernel(%arg0: i32, %arg1: memref<2x3xf32, #tpu.memory_space<vmem>>, %arg2: memref<32x16xf32, #tpu.memory_space<vmem>>, %arg3: memref<1x16xf32, #tpu.memory_space<vmem>>, %arg4: memref<16x32xf32, #tpu.memory_space<vmem>>, %arg5: memref<1x32xf32, #tpu.memory_space<vmem>>, %arg6: memref<3x32xf32, #tpu.memory_space<vmem>>, %arg7: memref<1x3xf32, #tpu.memory_space<vmem>>, %arg8: memref<2x8x32xf32, #tpu.memory_space<vmem>>, %arg9: memref<2x8x32xf32, #tpu.memory_space<vmem>>, %arg10: memref<2x8x32xf32, #tpu.memory_space<vmem>>, %arg11: memref<2x3xf32, #tpu.memory_space<vmem>>, %arg12: memref<2x3xf32, #tpu.memory_space<vmem>>, %arg13: memref<2x32xf32, #tpu.memory_space<vmem>>, %arg14: memref<2x32xf32, #tpu.memory_space<vmem>>, %arg15: memref<2x32xf32, #tpu.memory_space<vmem>>) attributes {dimension_semantics = [#tpu.dimension_semantics<arbitrary>], iteration_bounds = array<i64: 1>, scalar_prefetch = 0 : i64, scratch_operands = 3 : i64, tpu.core_type = #tpu.core_type<tc>, window_params = [{pipeline_mode = #tpu.pipeline_mode<synchronous>, transform_indices = @transform_0, window_bounds = array<i64: 2, 3>}, {pipeline_mode = #tpu.pipeline_mode<synchronous>, transform_indices = @transform_1, window_bounds = array<i64: 32, 16>}, {pipeline_mode = #tpu.pipeline_mode<synchronous>, transform_indices = @transform_2, window_bounds = array<i64: 1, 16>}, {pipeline_mode = #tpu.pipeline_mode<synchronous>, transform_indices = @transform_3, window_bounds = array<i64: 16, 32>}, {pipeline_mode = #tpu.pipeline_mode<synchronous>, transform_indices = @transform_4, window_bounds = array<i64: 1, 32>}, {pipeline_mode = #tpu.pipeline_mode<synchronous>, transform_indices = @transform_5, window_bounds = array<i64: 3, 32>}, {pipeline_mode = #tpu.pipeline_mode<synchronous>, transform_indices = @transform_6, window_bounds = array<i64: 1, 3>}, {transform_indices = @transform_7, window_bounds = array<i64: 2, 8, 32>}, {transform_indices = @transform_8, window_bounds = array<i64: 2, 8, 32>}, {transform_indices = @transform_9, window_bounds = array<i64: 2, 8, 32>}, {pipeline_mode = #tpu.pipeline_mode<synchronous>, transform_indices = @transform_10, window_bounds = array<i64: 2, 3>}, {pipeline_mode = #tpu.pipeline_mode<synchronous>, transform_indices = @transform_11, window_bounds = array<i64: 2, 3>}]} {
    %c0_i32 = arith.constant 0 : i32
    %0 = arith.cmpi eq, %arg0, %c0_i32 : i32
    %1 = arith.extui %0 : i1 to i32
    %c0_i32_0 = arith.constant 0 : i32
    %2 = arith.cmpi ne, %1, %c0_i32_0 : i32
    scf.if %2 {
      %cst_25 = arith.constant 0.000000e+00 : f32
      %21 = vector.broadcast %cst_25 : f32 to vector<2x32xf32>
      %c0_26 = arith.constant 0 : index
      %c0_27 = arith.constant 0 : index
      %22 = vector.load %arg13[%c0_26, %c0_27] : memref<2x32xf32, #tpu.memory_space<vmem>>, vector<2x32xf32>
      tpu.vector_store %arg13[%c0_26, %c0_27], %21 {strides = array<i32>} : memref<2x32xf32, #tpu.memory_space<vmem>>, vector<2x32xf32>,
      %cst_28 = arith.constant 0.000000e+00 : f32
      %23 = vector.broadcast %cst_28 : f32 to vector<2x32xf32>
      %c0_29 = arith.constant 0 : index
      %c0_30 = arith.constant 0 : index
      %24 = vector.load %arg14[%c0_29, %c0_30] : memref<2x32xf32, #tpu.memory_space<vmem>>, vector<2x32xf32>
      tpu.vector_store %arg14[%c0_29, %c0_30], %23 {strides = array<i32>} : memref<2x32xf32, #tpu.memory_space<vmem>>, vector<2x32xf32>,
      %cst_31 = arith.constant 0.000000e+00 : f32
      %25 = vector.broadcast %cst_31 : f32 to vector<2x32xf32>
      %c0_32 = arith.constant 0 : index
      %c0_33 = arith.constant 0 : index
      %26 = vector.load %arg15[%c0_32, %c0_33] : memref<2x32xf32, #tpu.memory_space<vmem>>, vector<2x32xf32>
      tpu.vector_store %arg15[%c0_32, %c0_33], %25 {strides = array<i32>} : memref<2x32xf32, #tpu.memory_space<vmem>>, vector<2x32xf32>,
    } else {
    }
    %c0 = arith.constant 0 : index
    %c0_1 = arith.constant 0 : index
    %3 = vector.load %arg13[%c0, %c0_1] : memref<2x32xf32, #tpu.memory_space<vmem>>, vector<2x32xf32>
    %c0_2 = arith.constant 0 : index
    %c0_3 = arith.constant 0 : index
    %c0_4 = arith.constant 0 : index
    %4 = vector.load %arg8[%c0_2, %c0_3, %c0_4] : memref<2x8x32xf32, #tpu.memory_space<vmem>>, vector<2x8x32xf32>
    %cst = arith.constant dense<0.000000e+00> : vector<2x32xf32>
    %5 = vector.multi_reduction <add>, %4, %cst [1] : vector<2x8x32xf32> to vector<2x32xf32>
    %6 = arith.addf %3, %5 : vector<2x32xf32>
    %c0_5 = arith.constant 0 : index
    %c0_6 = arith.constant 0 : index
    %7 = vector.load %arg13[%c0_5, %c0_6] : memref<2x32xf32, #tpu.memory_space<vmem>>, vector<2x32xf32>
    tpu.vector_store %arg13[%c0_5, %c0_6], %6 {strides = array<i32>} : memref<2x32xf32, #tpu.memory_space<vmem>>, vector<2x32xf32>,
    %c0_7 = arith.constant 0 : index
    %c0_8 = arith.constant 0 : index
    %8 = vector.load %arg14[%c0_7, %c0_8] : memref<2x32xf32, #tpu.memory_space<vmem>>, vector<2x32xf32>
    %c0_9 = arith.constant 0 : index
    %c0_10 = arith.constant 0 : index
    %c0_11 = arith.constant 0 : index
    %9 = vector.load %arg9[%c0_9, %c0_10, %c0_11] : memref<2x8x32xf32, #tpu.memory_space<vmem>>, vector<2x8x32xf32>
    %cst_12 = arith.constant dense<0.000000e+00> : vector<2x32xf32>
    %10 = vector.multi_reduction <add>, %9, %cst_12 [1] : vector<2x8x32xf32> to vector<2x32xf32>
    %11 = arith.addf %8, %10 : vector<2x32xf32>
    %c0_13 = arith.constant 0 : index
    %c0_14 = arith.constant 0 : index
    %12 = vector.load %arg14[%c0_13, %c0_14] : memref<2x32xf32, #tpu.memory_space<vmem>>, vector<2x32xf32>
    tpu.vector_store %arg14[%c0_13, %c0_14], %11 {strides = array<i32>} : memref<2x32xf32, #tpu.memory_space<vmem>>, vector<2x32xf32>,
    %c0_15 = arith.constant 0 : index
    %c0_16 = arith.constant 0 : index
    %13 = vector.load %arg15[%c0_15, %c0_16] : memref<2x32xf32, #tpu.memory_space<vmem>>, vector<2x32xf32>
    %c0_17 = arith.constant 0 : index
    %c0_18 = arith.constant 0 : index
    %c0_19 = arith.constant 0 : index
    %14 = vector.load %arg10[%c0_17, %c0_18, %c0_19] : memref<2x8x32xf32, #tpu.memory_space<vmem>>, vector<2x8x32xf32>
    %cst_20 = arith.constant dense<0.000000e+00> : vector<2x32xf32>
    %15 = vector.multi_reduction <add>, %14, %cst_20 [1] : vector<2x8x32xf32> to vector<2x32xf32>
    %16 = arith.addf %13, %15 : vector<2x32xf32>
    %c0_21 = arith.constant 0 : index
    %c0_22 = arith.constant 0 : index
    %17 = vector.load %arg15[%c0_21, %c0_22] : memref<2x32xf32, #tpu.memory_space<vmem>>, vector<2x32xf32>
    tpu.vector_store %arg15[%c0_21, %c0_22], %16 {strides = array<i32>} : memref<2x32xf32, #tpu.memory_space<vmem>>, vector<2x32xf32>,
    %c0_i32_23 = arith.constant 0 : i32
    %18 = arith.cmpi eq, %arg0, %c0_i32_23 : i32
    %19 = arith.extui %18 : i1 to i32
    %c0_i32_24 = arith.constant 0 : i32
    %20 = arith.cmpi ne, %19, %c0_i32_24 : i32
    scf.if %20 {
      %c0_25 = arith.constant 0 : index
      %c0_26 = arith.constant 0 : index
      %21 = vector.load %arg1[%c0_25, %c0_26] : memref<2x3xf32, #tpu.memory_space<vmem>>, vector<2x3xf32>
      %c0_27 = arith.constant 0 : index
      %c0_28 = arith.constant 0 : index
      %22 = vector.load %arg13[%c0_27, %c0_28] : memref<2x32xf32, #tpu.memory_space<vmem>>, vector<2x32xf32>
      %c0_29 = arith.constant 0 : index
      %c0_30 = arith.constant 0 : index
      %23 = vector.load %arg14[%c0_29, %c0_30] : memref<2x32xf32, #tpu.memory_space<vmem>>, vector<2x32xf32>
      %c0_31 = arith.constant 0 : index
      %c0_32 = arith.constant 0 : index
      %24 = vector.load %arg15[%c0_31, %c0_32] : memref<2x32xf32, #tpu.memory_space<vmem>>, vector<2x32xf32>
      %25 = tpu.concatenate %22, %23, %24 in 0 : vector<2x32xf32>, vector<2x32xf32>, vector<2x32xf32> -> vector<6x32xf32>
      %cst_33 = arith.constant 1.250000e-01 : f32
      %26 = vector.broadcast %cst_33 : f32 to vector<6x32xf32>
      %27 = arith.mulf %25, %26 : vector<6x32xf32>
      %c0_34 = arith.constant 0 : index
      %c0_35 = arith.constant 0 : index
      %28 = vector.load %arg2[%c0_34, %c0_35] : memref<32x16xf32, #tpu.memory_space<vmem>>, vector<32x16xf32>
      %cst_36 = arith.constant dense<0.000000e+00> : vector<6x16xf32>
      %29 = tpu.matmul %27, %28, %cst_36 {dimension_numbers = #tpu.dot_dimension_numbers<[1], [0], [0], [1], [0, 0, 1, 1], [], []>} : vector<6x32xf32>, vector<32x16xf32>, vector<6x16xf32> -> vector<6x16xf32>
      %c0_37 = arith.constant 0 : index
      %c0_38 = arith.constant 0 : index
      %30 = vector.load %arg3[%c0_37, %c0_38] : memref<1x16xf32, #tpu.memory_space<vmem>>, vector<1x16xf32>
      %31 = vector.broadcast %30 : vector<1x16xf32> to vector<6x16xf32>
      %32 = arith.addf %29, %31 : vector<6x16xf32>
      %cst_39 = arith.constant 0.000000e+00 : f32
      %33 = vector.broadcast %cst_39 : f32 to vector<6x16xf32>
      %34 = arith.maximumf %32, %33 : vector<6x16xf32>
      %c0_40 = arith.constant 0 : index
      %c0_41 = arith.constant 0 : index
      %35 = vector.load %arg4[%c0_40, %c0_41] : memref<16x32xf32, #tpu.memory_space<vmem>>, vector<16x32xf32>
      %cst_42 = arith.constant dense<0.000000e+00> : vector<6x32xf32>
      %36 = tpu.matmul %34, %35, %cst_42 {dimension_numbers = #tpu.dot_dimension_numbers<[1], [0], [0], [1], [0, 0, 1, 1], [], []>} : vector<6x16xf32>, vector<16x32xf32>, vector<6x32xf32> -> vector<6x32xf32>
      %c0_43 = arith.constant 0 : index
      %c0_44 = arith.constant 0 : index
      %37 = vector.load %arg5[%c0_43, %c0_44] : memref<1x32xf32, #tpu.memory_space<vmem>>, vector<1x32xf32>
      %38 = vector.broadcast %37 : vector<1x32xf32> to vector<6x32xf32>
      %39 = arith.addf %36, %38 : vector<6x32xf32>
      %40 = vector.extract_strided_slice %21 {offsets = [0, 0], sizes = [2, 1], strides = [1, 1]} : vector<2x3xf32> to vector<2x1xf32>
      %41 = vector.extract_strided_slice %21 {offsets = [0, 1], sizes = [2, 1], strides = [1, 1]} : vector<2x3xf32> to vector<2x1xf32>
      %42 = vector.extract_strided_slice %21 {offsets = [0, 2], sizes = [2, 1], strides = [1, 1]} : vector<2x3xf32> to vector<2x1xf32>
      %43 = tpu.concatenate %40, %41, %42 in 0 : vector<2x1xf32>, vector<2x1xf32>, vector<2x1xf32> -> vector<6x1xf32>
      %44 = vector.broadcast %43 : vector<6x1xf32> to vector<6x32xf32>
      %45 = arith.mulf %39, %44 : vector<6x32xf32>
      %c0_45 = arith.constant 0 : index
      %c0_46 = arith.constant 0 : index
      %46 = vector.load %arg6[%c0_45, %c0_46] : memref<3x32xf32, #tpu.memory_space<vmem>>, vector<3x32xf32>
      %47 = vector.extract_strided_slice %45 {offsets = [0, 0], sizes = [2, 32], strides = [1, 1]} : vector<6x32xf32> to vector<2x32xf32>
      %48 = vector.extract_strided_slice %46 {offsets = [0, 0], sizes = [1, 32], strides = [1, 1]} : vector<3x32xf32> to vector<1x32xf32>
      %49 = vector.broadcast %48 : vector<1x32xf32> to vector<2x32xf32>
      %50 = arith.mulf %47, %49 : vector<2x32xf32>
      %cst_47 = arith.constant dense<0.000000e+00> : vector<2xf32>
      %51 = vector.multi_reduction <add>, %50, %cst_47 [1] : vector<2x32xf32> to vector<2xf32>
      %52 = vector.shape_cast %51 : vector<2xf32> to vector<2x1xf32>
      %53 = vector.extract_strided_slice %45 {offsets = [2, 0], sizes = [2, 32], strides = [1, 1]} : vector<6x32xf32> to vector<2x32xf32>
      %54 = vector.extract_strided_slice %46 {offsets = [1, 0], sizes = [1, 32], strides = [1, 1]} : vector<3x32xf32> to vector<1x32xf32>
      %55 = vector.broadcast %54 : vector<1x32xf32> to vector<2x32xf32>
      %56 = arith.mulf %53, %55 : vector<2x32xf32>
      %cst_48 = arith.constant dense<0.000000e+00> : vector<2xf32>
      %57 = vector.multi_reduction <add>, %56, %cst_48 [1] : vector<2x32xf32> to vector<2xf32>
      %58 = vector.shape_cast %57 : vector<2xf32> to vector<2x1xf32>
      %59 = vector.extract_strided_slice %45 {offsets = [4, 0], sizes = [2, 32], strides = [1, 1]} : vector<6x32xf32> to vector<2x32xf32>
      %60 = vector.extract_strided_slice %46 {offsets = [2, 0], sizes = [1, 32], strides = [1, 1]} : vector<3x32xf32> to vector<1x32xf32>
      %61 = vector.broadcast %60 : vector<1x32xf32> to vector<2x32xf32>
      %62 = arith.mulf %59, %61 : vector<2x32xf32>
      %cst_49 = arith.constant dense<0.000000e+00> : vector<2xf32>
      %63 = vector.multi_reduction <add>, %62, %cst_49 [1] : vector<2x32xf32> to vector<2xf32>
      %64 = vector.shape_cast %63 : vector<2xf32> to vector<2x1xf32>
      %65 = tpu.concatenate %52, %58, %64 in 1 : vector<2x1xf32>, vector<2x1xf32>, vector<2x1xf32> -> vector<2x3xf32>
      %c0_50 = arith.constant 0 : index
      %c0_51 = arith.constant 0 : index
      %66 = vector.load %arg7[%c0_50, %c0_51] : memref<1x3xf32, #tpu.memory_space<vmem>>, vector<1x3xf32>
      %67 = vector.broadcast %66 : vector<1x3xf32> to vector<2x3xf32>
      %68 = arith.addf %65, %67 : vector<2x3xf32>
      %cst_52 = arith.constant dense<0xFF800000> : vector<2xf32>
      %69 = vector.multi_reduction <maximumf>, %68, %cst_52 [1] : vector<2x3xf32> to vector<2xf32>
      %70 = vector.shape_cast %69 : vector<2xf32> to vector<2x1xf32>
      %71 = vector.broadcast %70 : vector<2x1xf32> to vector<2x3xf32>
      %72 = arith.subf %68, %71 : vector<2x3xf32>
      %73 = math.exp %72 : vector<2x3xf32>
      %cst_53 = arith.constant dense<0.000000e+00> : vector<2xf32>
      %74 = vector.multi_reduction <add>, %73, %cst_53 [1] : vector<2x3xf32> to vector<2xf32>
      %75 = vector.shape_cast %74 : vector<2xf32> to vector<2x1xf32>
      %76 = vector.broadcast %75 : vector<2x1xf32> to vector<2x3xf32>
      %77 = arith.divf %73, %76 : vector<2x3xf32>
      %c0_54 = arith.constant 0 : index
      %c0_55 = arith.constant 0 : index
      %78 = vector.load %arg11[%c0_54, %c0_55] : memref<2x3xf32, #tpu.memory_space<vmem>>, vector<2x3xf32>
      tpu.vector_store %arg11[%c0_54, %c0_55], %77 {strides = array<i32>} : memref<2x3xf32, #tpu.memory_space<vmem>>, vector<2x3xf32>,
      %79 = arith.mulf %77, %21 : vector<2x3xf32>
      %c0_56 = arith.constant 0 : index
      %c0_57 = arith.constant 0 : index
      %80 = vector.load %arg12[%c0_56, %c0_57] : memref<2x3xf32, #tpu.memory_space<vmem>>, vector<2x3xf32>
      tpu.vector_store %arg12[%c0_56, %c0_57], %79 {strides = array<i32>} : memref<2x3xf32, #tpu.memory_space<vmem>>, vector<2x3xf32>,
    } else {
    }
    return
  }
  func.func @transform_0(%arg0: i32) -> (i32, i32) {
    %c0_i32 = arith.constant 0 : i32
    %c0_i32_0 = arith.constant 0 : i32
    %c0_i32_1 = arith.constant 0 : i32
    return %c0_i32, %c0_i32_0 : i32, i32
  }
  func.func @transform_1(%arg0: i32) -> (i32, i32) {
    %c0_i32 = arith.constant 0 : i32
    %c0_i32_0 = arith.constant 0 : i32
    %c0_i32_1 = arith.constant 0 : i32
    return %c0_i32, %c0_i32_0 : i32, i32
  }
  func.func @transform_2(%arg0: i32) -> (i32, i32) {
    %c0_i32 = arith.constant 0 : i32
    %c0_i32_0 = arith.constant 0 : i32
    %c0_i32_1 = arith.constant 0 : i32
    return %c0_i32, %c0_i32_0 : i32, i32
  }
  func.func @transform_3(%arg0: i32) -> (i32, i32) {
    %c0_i32 = arith.constant 0 : i32
    %c0_i32_0 = arith.constant 0 : i32
    %c0_i32_1 = arith.constant 0 : i32
    return %c0_i32, %c0_i32_0 : i32, i32
  }
  func.func @transform_4(%arg0: i32) -> (i32, i32) {
    %c0_i32 = arith.constant 0 : i32
    %c0_i32_0 = arith.constant 0 : i32
    %c0_i32_1 = arith.constant 0 : i32
    return %c0_i32, %c0_i32_0 : i32, i32
  }
  func.func @transform_5(%arg0: i32) -> (i32, i32) {
    %c0_i32 = arith.constant 0 : i32
    %c0_i32_0 = arith.constant 0 : i32
    %c0_i32_1 = arith.constant 0 : i32
    return %c0_i32, %c0_i32_0 : i32, i32
  }
  func.func @transform_6(%arg0: i32) -> (i32, i32) {
    %c0_i32 = arith.constant 0 : i32
    %c0_i32_0 = arith.constant 0 : i32
    %c0_i32_1 = arith.constant 0 : i32
    return %c0_i32, %c0_i32_0 : i32, i32
  }
  func.func @transform_7(%arg0: i32) -> (i32, i32, i32) {
    %c0_i32 = arith.constant 0 : i32
    %c0_i32_0 = arith.constant 0 : i32
    %c0_i32_1 = arith.constant 0 : i32
    return %c0_i32, %arg0, %c0_i32_0 : i32, i32, i32
  }
  func.func @transform_8(%arg0: i32) -> (i32, i32, i32) {
    %c0_i32 = arith.constant 0 : i32
    %c0_i32_0 = arith.constant 0 : i32
    %c0_i32_1 = arith.constant 0 : i32
    return %c0_i32, %arg0, %c0_i32_0 : i32, i32, i32
  }
  func.func @transform_9(%arg0: i32) -> (i32, i32, i32) {
    %c0_i32 = arith.constant 0 : i32
    %c0_i32_0 = arith.constant 0 : i32
    %c0_i32_1 = arith.constant 0 : i32
    return %c0_i32, %arg0, %c0_i32_0 : i32, i32, i32
  }
  func.func @transform_10(%arg0: i32) -> (i32, i32) {
    %c0_i32 = arith.constant 0 : i32
    %c0_i32_0 = arith.constant 0 : i32
    %c0_i32_1 = arith.constant 0 : i32
    return %c0_i32, %c0_i32_0 : i32, i32
  }
  func.func @transform_11(%arg0: i32) -> (i32, i32) {
    %c0_i32 = arith.constant 0 : i32
    %c0_i32_0 = arith.constant 0 : i32
    %c0_i32_1 = arith.constant 0 : i32
    return %c0_i32, %c0_i32_0 : i32, i32
  }
}

</mosaic_0001>

<llo_original>
// kernel: tpu_custom_call.1
$region0: #{tpu_custom_call.1}
  #allocation0 [shape = 'u32[]', space=smem, size = 0x4, offset = 0x4, fixed_abs, tag = 'smem constant byte address 0x4 - core index']
  #allocation1 [shape = 'u32[144,128]{1,0:T(1,128)}', space=vmem, size = 0x12000, scoped, tag = 'internal scratch']
  #allocation2 [shape = 'f32[2,32]{1,0:T(2,128)}', space=vmem, size = 0x400, scoped, tag = 'scratch operand']
  #allocation3 [shape = 'f32[2,32]{1,0:T(2,128)}', space=vmem, size = 0x400, scoped, tag = 'scratch operand']
  #allocation4 [shape = 'f32[2,32]{1,0:T(2,128)}', space=vmem, size = 0x400, scoped, tag = 'scratch operand']
  %s0 = inlined_call_operand.hbm [shape: f32[2,3], index: 0, kind: input, shape index: {}]
  %s1 = inlined_call_operand.vmem [shape: f32[32,16], index: 1, kind: input, shape index: {}]
  %s2 = inlined_call_operand.hbm [shape: f32[1,16], index: 2, kind: input, shape index: {}]
  %s3 = inlined_call_operand.vmem [shape: f32[16,32], index: 3, kind: input, shape index: {}]
  %s4 = inlined_call_operand.hbm [shape: f32[1,32], index: 4, kind: input, shape index: {}]
  %s5 = inlined_call_operand.hbm [shape: f32[3,32], index: 5, kind: input, shape index: {}]
  %s6 = inlined_call_operand.hbm [shape: f32[1,3], index: 6, kind: input, shape index: {}]
  %s7 = inlined_call_operand.vmem [shape: f32[2,8,32], index: 7, kind: input, shape index: {}]
  %s8 = inlined_call_operand.vmem [shape: f32[2,8,32], index: 8, kind: input, shape index: {}]
  %s9 = inlined_call_operand.vmem [shape: f32[2,8,32], index: 9, kind: input, shape index: {}]
  %s10 = inlined_call_operand.hbm [shape: f32[2,3], index: 10, kind: output, shape index: {0}]
  %s11 = inlined_call_operand.hbm [shape: f32[2,3], index: 11, kind: output, shape index: {1}]
  %12 = xla_tuple %s10, %s11
  %s13 = sld [smem:[#allocation0]]
  $region86: #{tpu_custom_call.1} parent=0
    _
  %s15 = ssub.s32 1, %s13
  %s16 = scalar_select 0, %s15, %s13
  $region1: #{tpu_custom_call.1} parent=0
    #allocation5 [shape = 'u8[1024]{0}', space=vmem, size = 0x400, scoped, tag = 'input window, operand 0, single buffered']
    #allocation6 [shape = 's32[1]{0}', space=sflag, size = 0x4, scoped, tag = 'scoped memory for tpu_custom_call.1']
    #allocation7 [shape = 's32[1]{0}', space=sflag, size = 0x4, scoped, tag = 'scoped memory for tpu_custom_call.1']
    #allocation8 [shape = 'u8[512]{0}', space=vmem, size = 0x400, scoped, tag = 'input window, operand 2, single buffered']
    #allocation9 [shape = 's32[1]{0}', space=sflag, size = 0x4, scoped, tag = 'scoped memory for tpu_custom_call.1']
    #allocation10 [shape = 'u8[512]{0}', space=vmem, size = 0x400, scoped, tag = 'input window, operand 4, single buffered']
    #allocation11 [shape = 'u8[2048]{0}', space=vmem, size = 0x800, scoped, tag = 'input window, operand 5, single buffered']
    #allocation12 [shape = 's32[1]{0}', space=sflag, size = 0x4, scoped, tag = 'scoped memory for tpu_custom_call.1']
    #allocation13 [shape = 'u8[512]{0}', space=vmem, size = 0x400, scoped, tag = 'input window, operand 6, single buffered']
    #allocation14 [shape = 'u8[1024]{0}', space=vmem, size = 0x400, scoped, tag = 'output window, operand 0, single buffered']
    #allocation15 [shape = 'u8[1024]{0}', space=vmem, size = 0x400, scoped, tag = 'output window, operand 1, single buffered']
    #allocation16 [shape = 's32[1]{0}', space=sflag, size = 0x4, scoped, tag = 'scoped memory for tpu_custom_call.1']
    %17 = vsyncpa [#allocation6], 0
    %18 = vsyncpa [#allocation9], 0
    %19 = vsyncpa [#allocation12], 0
    %20 = vsyncpa [#allocation7], 0
    %21 = vsyncpa [#allocation16], 0
    // Predicated region
    $region2: #{tpu_custom_call.1} parent=1 // pred_check
      _
    $region3: #{tpu_custom_call.1} parent=1 // pred_check_branch
      %23 = sbr.rel (0) target = $region5
    $region4: #{tpu_custom_call.1} parent=1 // pred_region
      %s25 = ssub.s32 32, 32
      %26 = vsyncadd [#allocation6], %s25
      %s28 = sshll.u32 [#allocation5], 4
      %s29 = int_to_ptr.vmem [resolvable:$true] %s28
      %31 = dma.hbm_to_vmem [thread:$0]  %s0, 32, %s29, [#allocation6]
    $region5: #{tpu_custom_call.1} parent=1 // pred_fallthru
      _
    // Predicated region
    $region6: #{tpu_custom_call.1} parent=1 // pred_check
      _
    $region7: #{tpu_custom_call.1} parent=1 // pred_check_branch
      %33 = sbr.rel (0) target = $region9
    $region8: #{tpu_custom_call.1} parent=1 // pred_region
      _
    $region9: #{tpu_custom_call.1} parent=1 // pred_fallthru
      _
    // Predicated region
    $region10: #{tpu_custom_call.1} parent=1 // pred_check
      _
    $region11: #{tpu_custom_call.1} parent=1 // pred_check_branch
      %35 = sbr.rel (0) target = $region13
    $region12: #{tpu_custom_call.1} parent=1 // pred_region
      %s37 = ssub.s32 16, 16
      %38 = vsyncadd [#allocation9], %s37
      %s40 = sshll.u32 [#allocation8], 4
      %s41 = int_to_ptr.vmem [resolvable:$true] %s40
      %43 = dma.hbm_to_vmem [thread:$0]  %s2, 16, %s41, [#allocation9]
    $region13: #{tpu_custom_call.1} parent=1 // pred_fallthru
      _
    // Predicated region
    $region14: #{tpu_custom_call.1} parent=1 // pred_check
      _
    $region15: #{tpu_custom_call.1} parent=1 // pred_check_branch
      %45 = sbr.rel (0) target = $region17
    $region16: #{tpu_custom_call.1} parent=1 // pred_region
      _
    $region17: #{tpu_custom_call.1} parent=1 // pred_fallthru
      _
    // Predicated region
    $region18: #{tpu_custom_call.1} parent=1 // pred_check
      _
    $region19: #{tpu_custom_call.1} parent=1 // pred_check_branch
      %47 = sbr.rel (0) target = $region21
    $region20: #{tpu_custom_call.1} parent=1 // pred_region
      %s49 = ssub.s32 16, 16
      %50 = vsyncadd [#allocation9], %s49
      %s52 = sshll.u32 [#allocation10], 4
      %s53 = int_to_ptr.vmem [resolvable:$true] %s52
      %55 = dma.hbm_to_vmem [thread:$0]  %s4, 16, %s53, [#allocation9]
    $region21: #{tpu_custom_call.1} parent=1 // pred_fallthru
      _
    // Predicated region
    $region22: #{tpu_custom_call.1} parent=1 // pred_check
      _
    $region23: #{tpu_custom_call.1} parent=1 // pred_check_branch
      %57 = sbr.rel (0) target = $region25
    $region24: #{tpu_custom_call.1} parent=1 // pred_region
      %s59 = ssub.s32 64, 64
      %60 = vsyncadd [#allocation12], %s59
      %s62 = sshll.u32 [#allocation11], 4
      %s63 = int_to_ptr.vmem [resolvable:$true] %s62
      %65 = dma.hbm_to_vmem [thread:$0]  %s5, 64, %s63, [#allocation12]
    $region25: #{tpu_custom_call.1} parent=1 // pred_fallthru
      _
    // Predicated region
    $region26: #{tpu_custom_call.1} parent=1 // pred_check
      _
    $region27: #{tpu_custom_call.1} parent=1 // pred_check_branch
      %67 = sbr.rel (0) target = $region29
    $region28: #{tpu_custom_call.1} parent=1 // pred_region
      %s69 = ssub.s32 16, 16
      %70 = vsyncadd [#allocation12], %s69
      %s72 = sshll.u32 [#allocation13], 4
      %s73 = int_to_ptr.vmem [resolvable:$true] %s72
      %75 = dma.hbm_to_vmem [thread:$0]  %s6, 16, %s73, [#allocation12]
    $region29: #{tpu_custom_call.1} parent=1 // pred_fallthru
      _
    // Predicated region
    $region30: #{tpu_custom_call.1} parent=1 // pred_check
      _
    $region31: #{tpu_custom_call.1} parent=1 // pred_check_branch
      %77 = sbr.rel (0) target = $region33
    $region32: #{tpu_custom_call.1} parent=1 // pred_region
      _
    $region33: #{tpu_custom_call.1} parent=1 // pred_fallthru
      _
    // Predicated region
    $region34: #{tpu_custom_call.1} parent=1 // pred_check
      _
    $region35: #{tpu_custom_call.1} parent=1 // pred_check_branch
      %79 = sbr.rel (0) target = $region37
    $region36: #{tpu_custom_call.1} parent=1 // pred_region
      _
    $region37: #{tpu_custom_call.1} parent=1 // pred_fallthru
      _
    // Predicated region
    $region38: #{tpu_custom_call.1} parent=1 // pred_check
      _
    $region39: #{tpu_custom_call.1} parent=1 // pred_check_branch
      %81 = sbr.rel (0) target = $region41
    $region40: #{tpu_custom_call.1} parent=1 // pred_region
      _
    $region41: #{tpu_custom_call.1} parent=1 // pred_fallthru
      _
    // Predicated region
    $region42: #{tpu_custom_call.1} parent=1 // pred_check
      _
    $region43: #{tpu_custom_call.1} parent=1 // pred_check_branch
      %83 = sbr.rel (0) target = $region45
    $region44: #{tpu_custom_call.1} parent=1 // pred_region
      %84 = dma.done [#allocation6], 32
    $region45: #{tpu_custom_call.1} parent=1 // pred_fallthru
      _
    // Predicated region
    $region46: #{tpu_custom_call.1} parent=1 // pred_check
      _
    $region47: #{tpu_custom_call.1} parent=1 // pred_check_branch
      %86 = sbr.rel (0) target = $region49
    $region48: #{tpu_custom_call.1} parent=1 // pred_region
      %87 = dma.done [#allocation9], 16
    $region49: #{tpu_custom_call.1} parent=1 // pred_fallthru
      _
    // Predicated region
    $region50: #{tpu_custom_call.1} parent=1 // pred_check
      _
    $region51: #{tpu_custom_call.1} parent=1 // pred_check_branch
      %89 = sbr.rel (0) target = $region53
    $region52: #{tpu_custom_call.1} parent=1 // pred_region
      %90 = dma.done [#allocation9], 16
    $region53: #{tpu_custom_call.1} parent=1 // pred_fallthru
      _
    // Predicated region
    $region54: #{tpu_custom_call.1} parent=1 // pred_check
      _
    $region55: #{tpu_custom_call.1} parent=1 // pred_check_branch
      %92 = sbr.rel (0) target = $region57
    $region56: #{tpu_custom_call.1} parent=1 // pred_region
      %93 = dma.done [#allocation12], 64
    $region57: #{tpu_custom_call.1} parent=1 // pred_fallthru
      _
    // Predicated region
    $region58: #{tpu_custom_call.1} parent=1 // pred_check
      _
    $region59: #{tpu_custom_call.1} parent=1 // pred_check_branch
      %95 = sbr.rel (0) target = $region61
    $region60: #{tpu_custom_call.1} parent=1 // pred_region
      %96 = dma.done [#allocation12], 16
    $region61: #{tpu_custom_call.1} parent=1 // pred_fallthru
      _
    %p97 = scmp.eq.s32.totalorder 0, 0
    // Predicated region
    $region62: #{tpu_custom_call.1} parent=1 // pred_check
      %p98 = pneg %p97
    $region63: #{tpu_custom_call.1} parent=1 // pred_check_branch
      %100 = sbr.rel (%p98) target = $region65
    $region64: #{tpu_custom_call.1} parent=1 // pred_region
      %vm101 = vcmask 254976
      %102 = vst.msk [vmem:[#allocation2] sm:$0x3] %vm101, 0.0
      %103 = vst.msk [vmem:[#allocation3] sm:$0x3] %vm101, 0.0
      %104 = vst.msk [vmem:[#allocation4] sm:$0x3] %vm101, 0.0
    $region65: #{tpu_custom_call.1} parent=1 // pred_fallthru
      _
    %v105 = vld [vmem:[#allocation2] sm:$0x3]
    %v106 = vld [vmem:[%s7] sm:$0xff]
    %v107 = vld [vmem:[%s7 + $0x8] sm:$0xff]
    %vm108 = vcmask 261120
    %v109 = vsel %vm108, %v106, 0.0
    %v110 = vrot.slane %v109, 4
    %v111 = vadd.f32 %v109, %v110
    %v112 = vrot.slane %v111, 2
    %v113 = vadd.f32 %v111, %v112
    %v114 = vrot.slane %v113, 1
    %v115 = vadd.f32 %v113, %v114
    %v116 = vsel %vm108, %v107, 0.0
    %v117 = vrot.slane %v116, 4
    %v118 = vadd.f32 %v116, %v117
    %v119 = vrot.slane %v118, 2
    %v120 = vadd.f32 %v118, %v119
    %v121 = vrot.slane %v120, 1
    %v122 = vadd.f32 %v120, %v121
    %vm125 = vcmask 1041409
    %v126 = vsel %vm125, %v122, %v115
    %v128 = vadd.f32 %v105, %v126
    %vm129 = vcmask 254976
    %130 = vst.msk [vmem:[#allocation2] sm:$0x3] %vm129, %v128
    %v131 = vld [vmem:[#allocation3] sm:$0x3]
    %v132 = vld [vmem:[%s8] sm:$0xff]
    %v133 = vld [vmem:[%s8 + $0x8] sm:$0xff]
    %v134 = vsel %vm108, %v132, 0.0
    %v135 = vrot.slane %v134, 4
    %v136 = vadd.f32 %v134, %v135
    %v137 = vrot.slane %v136, 2
    %v138 = vadd.f32 %v136, %v137
    %v139 = vrot.slane %v138, 1
    %v140 = vadd.f32 %v138, %v139
    %v141 = vsel %vm108, %v133, 0.0
    %v142 = vrot.slane %v141, 4
    %v143 = vadd.f32 %v141, %v142
    %v144 = vrot.slane %v143, 2
    %v145 = vadd.f32 %v143, %v144
    %v146 = vrot.slane %v145, 1
    %v147 = vadd.f32 %v145, %v146
    %v150 = vsel %vm125, %v147, %v140
    %v152 = vadd.f32 %v131, %v150
    %153 = vst.msk [vmem:[#allocation3] sm:$0x3] %vm129, %v152
    %v154 = vld [vmem:[#allocation4] sm:$0x3]
    %v155 = vld [vmem:[%s9] sm:$0xff]
    %v156 = vld [vmem:[%s9 + $0x8] sm:$0xff]
    %v157 = vsel %vm108, %v155, 0.0
    %v158 = vrot.slane %v157, 4
    %v159 = vadd.f32 %v157, %v158
    %v160 = vrot.slane %v159, 2
    %v161 = vadd.f32 %v159, %v160
    %v162 = vrot.slane %v161, 1
    %v163 = vadd.f32 %v161, %v162
    %v164 = vsel %vm108, %v156, 0.0
    %v165 = vrot.slane %v164, 4
    %v166 = vadd.f32 %v164, %v165
    %v167 = vrot.slane %v166, 2
    %v168 = vadd.f32 %v166, %v167
    %v169 = vrot.slane %v168, 1
    %v170 = vadd.f32 %v168, %v169
    %v173 = vsel %vm125, %v170, %v163
    %v175 = vadd.f32 %v154, %v173
    %176 = vst.msk [vmem:[#allocation4] sm:$0x3] %vm129, %v175
    // Predicated region
    $region66: #{tpu_custom_call.1} parent=1 // pred_check
      %p177 = pneg %p97
    $region67: #{tpu_custom_call.1} parent=1 // pred_check_branch
      %179 = sbr.rel (%p177) target = $region69
    $region68: #{tpu_custom_call.1} parent=1 // pred_region
      %v180 = vld [vmem:[#allocation5] sm:$0x3]
      %v181 = vld [vmem:[#allocation2] sm:$0x3]
      %v182 = vld [vmem:[#allocation3] sm:$0x3]
      %v183 = vld [vmem:[#allocation4] sm:$0x3]
      %v185 = vrot.slane %v182, 6
      %v188 = vrot.slane %v183, 4
      %vm190 = vcmask 1041408
      %v191 = vsel %vm190, %v181, %v185
      %vm192 = vcmask 1043456
      %v193 = vsel %vm192, %v191, %v188
      %v194 = vmul.f32 %v193, 0.125
      %v195 = vld [vmem:[%s1] sm:$0xff]
      %v196 = vld [vmem:[%s1 + $0x8] sm:$0xff]
      %v197 = vld [vmem:[%s1 + $0x10] sm:$0xff]
      %v198 = vld [vmem:[%s1 + $0x18] sm:$0xff]
      %v199 = vld [vmem:[#allocation8] sm:$0x1]
      %v201 = vlaneseq
      %v202 = vshrl.u32 %v201, 7
      %v203 = vsub.s32 0, %v202
      %v204 = vrot.slane %v199, %v203
      %v207 = vsel %vm108, %v194, 0
      %209 = vmatprep.subr.mxu0 0.0
      %210 = vmatpush1.msra.mxu0 0.0
      %211 = vmatprep.subr.mxu0 0.0
      %212 = vmatpush1.msra.mxu0 0.0
      %213 = vmatprep.subr.mxu0 0.0
      %214 = vmatpush1.msra.mxu0 0.0
      %215 = vmatprep.subr.mxu0 0.0
      %216 = vmatpush1.msra.mxu0 0.0
      %217 = vmatprep.subr.mxu0 0.0
      %218 = vmatpush1.msra.mxu0 0.0
      %219 = vmatprep.subr.mxu0 0.0
      %220 = vmatpush1.msra.mxu0 0.0
      %221 = vmatprep.subr.mxu0 0.0
      %222 = vmatpush1.msra.mxu0 0.0
      %223 = vmatprep.subr.mxu0 0.0
      %224 = vmatpush1.msra.mxu0 0.0
      %225 = vmatprep.subr.mxu0 0.0
      %226 = vmatpush1.msra.mxu0 0.0
      %227 = vmatprep.subr.mxu0 0.0
      %228 = vmatpush1.msra.mxu0 0.0
      %229 = vmatprep.subr.mxu0 0.0
      %230 = vmatpush1.msra.mxu0 0.0
      %231 = vmatprep.subr.mxu0 0.0
      %232 = vmatpush1.msra.mxu0 0.0
      %233 = vmatprep.subr.mxu0 0.0
      %234 = vmatpush1.msra.mxu0 %v198
      %235 = vmatprep.subr.mxu0 0.0
      %236 = vmatpush1.msra.mxu0 %v197
      %237 = vmatprep.subr.mxu0 0.0
      %238 = vmatpush1.msra.mxu0 %v196
      %239 = vmatprep.subr.mxu0 0.0
      %240 = vmatpush1.msra.mxu0 %v195
      %241 = vmatprep.subr.mxu0 0.0
      %242 = vmatpush2.msra.mxu0 0.0
      %243 = vmatprep.subr.mxu0 0.0
      %244 = vmatpush2.msra.mxu0 0.0
      %245 = vmatprep.subr.mxu0 0.0
      %246 = vmatpush2.msra.mxu0 0.0
      %247 = vmatprep.subr.mxu0 0.0
      %248 = vmatpush2.msra.mxu0 0.0
      %249 = vmatprep.subr.mxu0 0.0
      %250 = vmatpush2.msra.mxu0 0.0
      %251 = vmatprep.subr.mxu0 0.0
      %252 = vmatpush2.msra.mxu0 0.0
      %253 = vmatprep.subr.mxu0 0.0
      %254 = vmatpush2.msra.mxu0 0.0
      %255 = vmatprep.subr.mxu0 0.0
      %256 = vmatpush2.msra.mxu0 0.0
      %257 = vmatprep.subr.mxu0 0.0
      %258 = vmatpush2.msra.mxu0 0.0
      %259 = vmatprep.subr.mxu0 0.0
      %260 = vmatpush2.msra.mxu0 0.0
      %261 = vmatprep.subr.mxu0 0.0
      %262 = vmatpush2.msra.mxu0 0.0
      %263 = vmatprep.subr.mxu0 0.0
      %264 = vmatpush2.msra.mxu0 0.0
      %265 = vmatprep.subr.mxu0 0.0
      %266 = vmatpush2.msra.mxu0 0.0
      %267 = vmatprep.subr.mxu0 0.0
      %268 = vmatpush2.msra.mxu0 0.0
      %269 = vmatprep.subr.mxu0 0.0
      %270 = vmatpush2.msra.mxu0 0.0
      %271 = vmatprep.subr.mxu0 0.0
      %272 = vmatpush2.msra.mxu0 0.0
      %273 = vmatprep.mubr.f32.mxu0 0.0
      %274 = vmatmul.mubr.f32.gmra.mxu0 %v207
      %v275 = vpop.f32.mrf.mxu0
      %v276 = vadd.f32 %v204, %v275
      %v277 = vpop.f32.mrf.mxu0
      %278 = vdwg.mxu0
      %v279 = vmax.f32 %v276, 0.0
      %v280 = vld [vmem:[%s3] sm:$0xff]
      %v281 = vld [vmem:[%s3 + $0x8] sm:$0xff]
      %v282 = vld [vmem:[#allocation10] sm:$0x1]
      %v284 = vlaneseq
      %v285 = vshrl.u32 %v284, 7
      %v286 = vsub.s32 0, %v285
      %v287 = vrot.slane %v282, %v286
      %vm289 = vcmask 130048
      %v291 = vsel %vm289, %v279, 0
      %293 = vmatprep.subr.mxu0 0.0
      %294 = vmatpush1.msra.mxu0 0.0
      %295 = vmatprep.subr.mxu0 0.0
      %296 = vmatpush1.msra.mxu0 0.0
      %297 = vmatprep.subr.mxu0 0.0
      %298 = vmatpush1.msra.mxu0 0.0
      %299 = vmatprep.subr.mxu0 0.0
      %300 = vmatpush1.msra.mxu0 0.0
      %301 = vmatprep.subr.mxu0 0.0
      %302 = vmatpush1.msra.mxu0 0.0
      %303 = vmatprep.subr.mxu0 0.0
      %304 = vmatpush1.msra.mxu0 0.0
      %305 = vmatprep.subr.mxu0 0.0
      %306 = vmatpush1.msra.mxu0 0.0
      %307 = vmatprep.subr.mxu0 0.0
      %308 = vmatpush1.msra.mxu0 0.0
      %309 = vmatprep.subr.mxu0 0.0
      %310 = vmatpush1.msra.mxu0 0.0
      %311 = vmatprep.subr.mxu0 0.0
      %312 = vmatpush1.msra.mxu0 0.0
      %313 = vmatprep.subr.mxu0 0.0
      %314 = vmatpush1.msra.mxu0 0.0
      %315 = vmatprep.subr.mxu0 0.0
      %316 = vmatpush1.msra.mxu0 0.0
      %317 = vmatprep.subr.mxu0 0.0
      %318 = vmatpush1.msra.mxu0 0.0
      %319 = vmatprep.subr.mxu0 0.0
      %320 = vmatpush1.msra.mxu0 0.0
      %321 = vmatprep.subr.mxu0 0.0
      %322 = vmatpush1.msra.mxu0 %v281
      %323 = vmatprep.subr.mxu0 0.0
      %324 = vmatpush1.msra.mxu0 %v280
      %325 = vmatprep.subr.mxu0 0.0
      %326 = vmatpush2.msra.mxu0 0.0
      %327 = vmatprep.subr.mxu0 0.0
      %328 = vmatpush2.msra.mxu0 0.0
      %329 = vmatprep.subr.mxu0 0.0
      %330 = vmatpush2.msra.mxu0 0.0
      %331 = vmatprep.subr.mxu0 0.0
      %332 = vmatpush2.msra.mxu0 0.0
      %333 = vmatprep.subr.mxu0 0.0
      %334 = vmatpush2.msra.mxu0 0.0
      %335 = vmatprep.subr.mxu0 0.0
      %336 = vmatpush2.msra.mxu0 0.0
      %337 = vmatprep.subr.mxu0 0.0
      %338 = vmatpush2.msra.mxu0 0.0
      %339 = vmatprep.subr.mxu0 0.0
      %340 = vmatpush2.msra.mxu0 0.0
      %341 = vmatprep.subr.mxu0 0.0
      %342 = vmatpush2.msra.mxu0 0.0
      %343 = vmatprep.subr.mxu0 0.0
      %344 = vmatpush2.msra.mxu0 0.0
      %345 = vmatprep.subr.mxu0 0.0
      %346 = vmatpush2.msra.mxu0 0.0
      %347 = vmatprep.subr.mxu0 0.0
      %348 = vmatpush2.msra.mxu0 0.0
      %349 = vmatprep.subr.mxu0 0.0
      %350 = vmatpush2.msra.mxu0 0.0
      %351 = vmatprep.subr.mxu0 0.0
      %352 = vmatpush2.msra.mxu0 0.0
      %353 = vmatprep.subr.mxu0 0.0
      %354 = vmatpush2.msra.mxu0 0.0
      %355 = vmatprep.subr.mxu0 0.0
      %356 = vmatpush2.msra.mxu0 0.0
      %357 = vmatprep.mubr.f32.mxu0 0.0
      %358 = vmatmul.mubr.f32.gmra.mxu0 %v291
      %v359 = vpop.f32.mrf.mxu0
      %v360 = vadd.f32 %v287, %v359
      %v361 = vpop.f32.mrf.mxu0
      %362 = vdwg.mxu0
      %v364 = vrot.slane %v180, 6
      %365 = vrot.lane.b32.xlu0 %v364, 127
      %v366 = vpop.permute.xlu0 %365
      %v368 = vrot.slane %v180, 4
      %369 = vrot.lane.b32.xlu0 %v368, 126
      %v370 = vpop.permute.xlu0 %369
      %v372 = vsel %vm190, %v180, %v366
      %v373 = vsel %vm192, %v372, %v370
      %375 = vset.pattern.permute.xlu0 0
      %376 = vperm.xlu0 %375, %v373
      %v377 = vpop.permute.xlu0 %376
      %v379 = vmul.f32 %v360, %v377
      %v380 = vld [vmem:[#allocation11] sm:$0x7]
      %v381 = vlaneseq
      %v382 = vshrl.u32 %v381, 7
      %v383 = vsub.s32 0, %v382
      %v384 = vrot.slane %v380, %v383
      %v385 = vmul.f32 %v379, %v384
      %v386 = vsel %vm129, %v385, 0.0
      %387 = vadd.xlane.f32.xlu0 %v386
      %v388 = vpop.xlane.xlu0 %387
      %v389 = vlaneseq
      %v390 = vshrl.u32 %v389, 7
      %v391 = vsub.s32 1, %v390
      %v392 = vrot.slane %v380, %v391
      %v393 = vmul.f32 %v379, %v392
      %vm394 = vcmask 257026
      %v395 = vsel %vm394, %v393, 0.0
      %396 = vadd.xlane.f32.xlu0 %v395
      %v397 = vpop.xlane.xlu0 %396
      %v398 = vlaneseq
      %v399 = vshrl.u32 %v398, 7
      %v400 = vsub.s32 2, %v399
      %v401 = vrot.slane %v380, %v400
      %v402 = vmul.f32 %v379, %v401
      %vm403 = vcmask 259076
      %v404 = vsel %vm403, %v402, 0.0
      %405 = vadd.xlane.f32.xlu0 %v404
      %v406 = vpop.xlane.xlu0 %405
      %v408 = vrot.slane %v397, 2
      %v411 = vrot.slane %v406, 4
      %vm413 = vcmask 7168
      %v414 = vsel %vm413, %v388, %v408
      %vm415 = vcmask 15360
      %v416 = vsel %vm415, %v414, %v411
      %v417 = vld [vmem:[#allocation13] sm:$0x1]
      %v419 = vlaneseq
      %v420 = vshrl.u32 %v419, 7
      %v421 = vsub.s32 0, %v420
      %v422 = vrot.slane %v417, %v421
      %v424 = vadd.f32 %v416, %v422
      %vm425 = vcmask 17408
      %v426 = vsel %vm425, %v424, -inf
      %427 = vmax.xlane.f32.xlu0 %v426
      %v428 = vpop.xlane.xlu0 %427
      %v429 = vsub.f32 %v424, %v428
      %v430 = vmul.f32 %v429, 1.442695
      %v431 = vpow.pop %v430
      %v432 = vsel %vm425, %v431, 0.0
      %433 = vadd.xlane.f32.xlu0 %v432
      %v434 = vpop.xlane.xlu0 %433
      %v435 = vrcp.pop %v434
      %v436 = vmul.f32 %v431, %v435
      %437 = vst.msk [vmem:[#allocation14] sm:$0x3] %vm425, %v436
      %v438 = vmul.f32 %v436, %v180
      %439 = vst.msk [vmem:[#allocation15] sm:$0x3] %vm425, %v438
    $region69: #{tpu_custom_call.1} parent=1 // pred_fallthru
      _
    // Predicated region
    $region70: #{tpu_custom_call.1} parent=1 // pred_check
      _
    $region71: #{tpu_custom_call.1} parent=1 // pred_check_branch
      %441 = sbr.rel (0) target = $region73
    $region72: #{tpu_custom_call.1} parent=1 // pred_region
      %s443 = ssub.s32 32, 32
      %444 = vsyncadd [#allocation7], %s443
      %s446 = sshll.u32 [#allocation14], 4
      %s447 = int_to_ptr.vmem [resolvable:$true] %s446
      %449 = dma.vmem_to_hbm [thread:$0]  %s447, 32, %s10, [#allocation7]
    $region73: #{tpu_custom_call.1} parent=1 // pred_fallthru
      _
    // Predicated region
    $region74: #{tpu_custom_call.1} parent=1 // pred_check
      _
    $region75: #{tpu_custom_call.1} parent=1 // pred_check_branch
      %451 = sbr.rel (0) target = $region77
    $region76: #{tpu_custom_call.1} parent=1 // pred_region
      %s453 = ssub.s32 32, 32
      %454 = vsyncadd [#allocation16], %s453
      %s456 = sshll.u32 [#allocation15], 4
      %s457 = int_to_ptr.vmem [resolvable:$true] %s456
      %459 = dma.vmem_to_hbm [thread:$0]  %s457, 32, %s11, [#allocation16]
    $region77: #{tpu_custom_call.1} parent=1 // pred_fallthru
      _
    // Predicated region
    $region78: #{tpu_custom_call.1} parent=1 // pred_check
      _
    $region79: #{tpu_custom_call.1} parent=1 // pred_check_branch
      %461 = sbr.rel (0) target = $region81
    $region80: #{tpu_custom_call.1} parent=1 // pred_region
      %462 = dma.done [#allocation7], 32
    $region81: #{tpu_custom_call.1} parent=1 // pred_fallthru
      _
    // Predicated region
    $region82: #{tpu_custom_call.1} parent=1 // pred_check
      _
    $region83: #{tpu_custom_call.1} parent=1 // pred_check_branch
      %464 = sbr.rel (0) target = $region85
    $region84: #{tpu_custom_call.1} parent=1 // pred_region
      %465 = dma.done [#allocation16], 32
    $region85: #{tpu_custom_call.1} parent=1 // pred_fallthru
      _
    %466 = vsyncpa [#allocation6], 1
    %467 = vsyncpa [#allocation9], 1
    %468 = vsyncpa [#allocation12], 1
    %469 = vsyncpa [#allocation7], 1
    %470 = vsyncpa [#allocation16], 1

</llo_original>
